<compile_context>
chip_gen: v6e
topology: v6e:2x2x1
jax: 0.10.0
libtpu: 0.0.40
codegen_flags: <defaults>
</compile_context>

<pallas_src>
import jax
import jax.numpy as jnp
from jax.experimental import pallas as pl
from jax.experimental.pallas import tpu as pltpu


def mlp_kernel(x_ref, w1_ref, b1_ref, w2t_ref, b2_ref, o_ref):
    # x_ref:   [2, T]   (features on sublanes, batch on lanes)
    # w1_ref:  [8, 2]   (PyTorch Linear weight layout: [out, in])
    # b1_ref:  [8, 1]
    # w2t_ref: [8, 1]   (second Linear weight, transposed to a sublane column)
    # b2_ref:  [1, 1]
    # o_ref:   [1, T]
    x0 = x_ref[0:1, :]                       # (1, T)
    x1 = x_ref[1:2, :]                       # (1, T)
    w1 = w1_ref[...]                         # (8, 2)

    # Hidden layer as two broadcast FMAs on the VPU: (8,1)*(1,T) -> (8,T).
    h = w1[:, 0:1] * x0 + w1[:, 1:2] * x1 + b1_ref[...]
    h = jnp.maximum(h, 0.0)                  # ReLU, (8, T)

    # Output layer: per-sublane scale then a sublane reduce (XLU) -> (1, T).
    out = jnp.sum(w2t_ref[...] * h, axis=0, keepdims=True) + b2_ref[...]
    o_ref[...] = out.astype(o_ref.dtype)


def mlp_forward(x, w1, b1, w2, b2, *, tile_n=16384):
    """x: [N, 2] f32; w1: [8, 2]; b1: [8]; w2: [1, 8]; b2: [1]. Returns [N, 1]."""
    n, f_in = x.shape
    assert f_in == 2

    # Lane tile: big to amortize per-step overhead, but never bigger than the
    # (128-rounded) problem.  n_pad is a multiple of the tile.
    tile = tile_n if n >= tile_n else pl.cdiv(n, 128) * 128
    n_pad = pl.cdiv(n, tile) * tile

    # Batch on lanes; zero-pad the tail (padded lanes are sliced off below).
    xt = jnp.zeros((2, n_pad), jnp.float32).at[:, :n].set(x.T.astype(jnp.float32))

    w1c = w1.astype(jnp.float32)              # (8, 2)
    b1c = b1.reshape(8, 1).astype(jnp.float32)
    w2t = w2.reshape(1, 8).T.astype(jnp.float32)  # (8, 1)
    b2c = b2.reshape(1, 1).astype(jnp.float32)

    out = pl.pallas_call(
        mlp_kernel,
        out_shape=jax.ShapeDtypeStruct((1, n_pad), jnp.float32),
        grid_spec=pltpu.PrefetchScalarGridSpec(
            num_scalar_prefetch=0,
            grid=(n_pad // tile,),
            in_specs=[
                # Activations: one lane-dense tile per grid step.
                pl.BlockSpec((2, tile), lambda i: (0, i)),
                # Parameters: full-array blocks, grid-invariant -> DMA'd once,
                # resident in VMEM across all steps.
                pl.BlockSpec((8, 2), lambda i: (0, 0)),
                pl.BlockSpec((8, 1), lambda i: (0, 0)),
                pl.BlockSpec((8, 1), lambda i: (0, 0)),
                pl.BlockSpec((1, 1), lambda i: (0, 0)),
            ],
            out_specs=pl.BlockSpec((1, tile), lambda i: (0, i)),
        ),
        compiler_params=pltpu.CompilerParams(
            dimension_semantics=("parallel",),  # shard N across TCs (v7x megacore)
        ),
    )(xt, w1c, b1c, w2t, b2c)

    # Back to PyTorch layout: (N, 1).
    return out[:, :n].T


def init_params(key):
    """Deterministic init mirroring nn.Linear shapes: W1 (8,2), b1 (8,), W2 (1,8), b2 (1,)."""
    k1, k2, k3, k4 = jax.random.split(key, 4)
    bound1 = 1.0 / jnp.sqrt(2.0)   # fan_in = 2
    bound2 = 1.0 / jnp.sqrt(8.0)   # fan_in = 8
    w1 = jax.random.uniform(k1, (8, 2), jnp.float32, -bound1, bound1)
    b1 = jax.random.uniform(k2, (8,), jnp.float32, -bound1, bound1)
    w2 = jax.random.uniform(k3, (1, 8), jnp.float32, -bound2, bound2)
    b2 = jax.random.uniform(k4, (1,), jnp.float32, -bound2, bound2)
    return w1, b1, w2, b2


if __name__ == "__main__":
    key = jax.random.PRNGKey(0)
    kx, kp = jax.random.split(key)

    # Small batch of inputs with 2 features each (matches Linear(2, ...)).
    x = jax.random.normal(kx, (8, 2), jnp.float32)
    w1, b1, w2, b2 = init_params(kp)

    out = mlp_forward(x, w1, b1, w2, b2)
    out = jax.block_until_ready(out)

    # Reference check in plain JAX (same math as the PyTorch forward).
    ref = jnp.maximum(x @ w1.T + b1, 0.0) @ w2.T + b2
    assert out.shape == (8, 1)
    assert jnp.allclose(out, ref, atol=1e-5, rtol=1e-5)

    print("KERNEL_OK")
</pallas_src>

<mosaic_0001>
module attributes {stable_mosaic.version = 11 : i64} {
  func.func @mlp_kernel(%arg0: i32, %arg1: memref<2x128xf32, #tpu.memory_space<vmem>>, %arg2: memref<8x2xf32, #tpu.memory_space<vmem>>, %arg3: memref<8x1xf32, #tpu.memory_space<vmem>>, %arg4: memref<8x1xf32, #tpu.memory_space<vmem>>, %arg5: memref<1x1xf32, #tpu.memory_space<vmem>>, %arg6: memref<1x128xf32, #tpu.memory_space<vmem>>) attributes {dimension_semantics = [#tpu.dimension_semantics<parallel>], iteration_bounds = array<i64: 1>, scalar_prefetch = 0 : i64, scratch_operands = 0 : i64, tpu.core_type = #tpu.core_type<tc>, window_params = [{transform_indices = @transform_0, window_bounds = array<i64: 2, 128>}, {pipeline_mode = #tpu.pipeline_mode<synchronous>, transform_indices = @transform_1, window_bounds = array<i64: 8, 2>}, {pipeline_mode = #tpu.pipeline_mode<synchronous>, transform_indices = @transform_2, window_bounds = array<i64: 8, 1>}, {pipeline_mode = #tpu.pipeline_mode<synchronous>, transform_indices = @transform_3, window_bounds = array<i64: 8, 1>}, {pipeline_mode = #tpu.pipeline_mode<synchronous>, transform_indices = @transform_4, window_bounds = array<i64: 1, 1>}, {transform_indices = @transform_5, window_bounds = array<i64: 1, 128>}]} {
    %c0 = arith.constant 0 : index
    %c0_0 = arith.constant 0 : index
    %0 = vector.load %arg1[%c0, %c0_0] : memref<2x128xf32, #tpu.memory_space<vmem>>, vector<1x128xf32>
    %c1 = arith.constant 1 : index
    %c0_1 = arith.constant 0 : index
    %1 = vector.load %arg1[%c1, %c0_1] : memref<2x128xf32, #tpu.memory_space<vmem>>, vector<1x128xf32>
    %c0_2 = arith.constant 0 : index
    %c0_3 = arith.constant 0 : index
    %2 = vector.load %arg2[%c0_2, %c0_3] : memref<8x2xf32, #tpu.memory_space<vmem>>, vector<8x2xf32>
    %3 = vector.extract_strided_slice %2 {offsets = [0, 0], sizes = [8, 1], strides = [1, 1]} : vector<8x2xf32> to vector<8x1xf32>
    %4 = vector.broadcast %3 : vector<8x1xf32> to vector<8x128xf32>
    %5 = vector.broadcast %0 : vector<1x128xf32> to vector<8x128xf32>
    %6 = arith.mulf %4, %5 : vector<8x128xf32>
    %7 = vector.extract_strided_slice %2 {offsets = [0, 1], sizes = [8, 1], strides = [1, 1]} : vector<8x2xf32> to vector<8x1xf32>
    %8 = vector.broadcast %7 : vector<8x1xf32> to vector<8x128xf32>
    %9 = vector.broadcast %1 : vector<1x128xf32> to vector<8x128xf32>
    %10 = arith.mulf %8, %9 : vector<8x128xf32>
    %11 = arith.addf %6, %10 : vector<8x128xf32>
    %c0_4 = arith.constant 0 : index
    %c0_5 = arith.constant 0 : index
    %12 = vector.load %arg3[%c0_4, %c0_5] : memref<8x1xf32, #tpu.memory_space<vmem>>, vector<8x1xf32>
    %13 = vector.broadcast %12 : vector<8x1xf32> to vector<8x128xf32>
    %14 = arith.addf %11, %13 : vector<8x128xf32>
    %cst = arith.constant 0.000000e+00 : f32
    %15 = vector.broadcast %cst : f32 to vector<8x128xf32>
    %16 = arith.maximumf %14, %15 : vector<8x128xf32>
    %c0_6 = arith.constant 0 : index
    %c0_7 = arith.constant 0 : index
    %17 = vector.load %arg4[%c0_6, %c0_7] : memref<8x1xf32, #tpu.memory_space<vmem>>, vector<8x1xf32>
    %18 = vector.broadcast %17 : vector<8x1xf32> to vector<8x128xf32>
    %19 = arith.mulf %18, %16 : vector<8x128xf32>
    %cst_8 = arith.constant dense<0.000000e+00> : vector<128xf32>
    %20 = vector.multi_reduction <add>, %19, %cst_8 [0] : vector<8x128xf32> to vector<128xf32>
    %21 = vector.shape_cast %20 : vector<128xf32> to vector<1x128xf32>
    %c0_9 = arith.constant 0 : index
    %c0_10 = arith.constant 0 : index
    %22 = vector.load %arg5[%c0_9, %c0_10] : memref<1x1xf32, #tpu.memory_space<vmem>>, vector<1x1xf32>
    %23 = vector.broadcast %22 : vector<1x1xf32> to vector<1x128xf32>
    %24 = arith.addf %21, %23 : vector<1x128xf32>
    %c0_11 = arith.constant 0 : index
    %c0_12 = arith.constant 0 : index
    %25 = vector.load %arg6[%c0_11, %c0_12] : memref<1x128xf32, #tpu.memory_space<vmem>>, vector<1x128xf32>
    tpu.vector_store %arg6[%c0_11, %c0_12], %24 {strides = array<i32>} : memref<1x128xf32, #tpu.memory_space<vmem>>, vector<1x128xf32>,
    return
  }
  func.func @transform_0(%arg0: i32) -> (i32, i32) {
    %c0_i32 = arith.constant 0 : i32
    %c0_i32_0 = arith.constant 0 : i32
    return %c0_i32, %arg0 : i32, i32
  }
  func.func @transform_1(%arg0: i32) -> (i32, i32) {
    %c0_i32 = arith.constant 0 : i32
    %c0_i32_0 = arith.constant 0 : i32
    %c0_i32_1 = arith.constant 0 : i32
    return %c0_i32, %c0_i32_0 : i32, i32
  }
  func.func @transform_2(%arg0: i32) -> (i32, i32) {
    %c0_i32 = arith.constant 0 : i32
    %c0_i32_0 = arith.constant 0 : i32
    %c0_i32_1 = arith.constant 0 : i32
    return %c0_i32, %c0_i32_0 : i32, i32
  }
  func.func @transform_3(%arg0: i32) -> (i32, i32) {
    %c0_i32 = arith.constant 0 : i32
    %c0_i32_0 = arith.constant 0 : i32
    %c0_i32_1 = arith.constant 0 : i32
    return %c0_i32, %c0_i32_0 : i32, i32
  }
  func.func @transform_4(%arg0: i32) -> (i32, i32) {
    %c0_i32 = arith.constant 0 : i32
    %c0_i32_0 = arith.constant 0 : i32
    %c0_i32_1 = arith.constant 0 : i32
    return %c0_i32, %c0_i32_0 : i32, i32
  }
  func.func @transform_5(%arg0: i32) -> (i32, i32) {
    %c0_i32 = arith.constant 0 : i32
    %c0_i32_0 = arith.constant 0 : i32
    return %c0_i32, %arg0 : i32, i32
  }
}

</mosaic_0001>

<llo_original>
// kernel: tpu_custom_call.1
$region0: #{tpu_custom_call.1}
  #allocation0 [shape = 'u32[]', space=smem, size = 0x4, offset = 0x4, fixed_abs, tag = 'smem constant byte address 0x4 - core index']
  #allocation1 [shape = 'u32[144,128]{1,0:T(1,128)}', space=vmem, size = 0x12000, scoped, tag = 'internal scratch']
  #allocation2 [shape = 'f32[1,1]{1,0:T(1,128)S(1)}', space=vmem, size = 0x200, scoped, tag = 'scoped memory for tpu_custom_call.1']
  %s0 = inlined_call_operand.vmem [shape: f32[2,128], index: 0, kind: input, shape index: {}]
  %s1 = inlined_call_operand.vmem [shape: f32[8,2], index: 1, kind: input, shape index: {}]
  %s2 = inlined_call_operand.vmem [shape: f32[8,1], index: 2, kind: input, shape index: {}]
  %s3 = inlined_call_operand.vmem [shape: f32[8,1], index: 3, kind: input, shape index: {}]
  %s4 = inlined_call_operand.<no memory space> [shape: f32[1,1], index: 4, kind: input, shape index: {}]
  %s5 = inlined_call_operand.hbm [shape: f32[1,128], index: 5, kind: output, shape index: {}]
  %s6 = sld [smem:[#allocation0]]
  $region30: #{tpu_custom_call.1} parent=0
    _
  %s8 = ssub.s32 1, %s6
  %s9 = scalar_select 0, %s8, %s6
  %v10 = vstv %s4
  %11 = vst [vmem:[#allocation2] sm:$0x1] %v10
  $region1: #{tpu_custom_call.1} parent=0
    #allocation3 [shape = 'u8[512]{0}', space=vmem, size = 0x400, scoped, tag = 'output window, operand 0, single buffered']
    #allocation4 [shape = 's32[1]{0}', space=sflag, size = 0x4, scoped, tag = 'scoped memory for tpu_custom_call.1']
    %12 = vsyncpa [#allocation4], 0
    // Predicated region
    $region2: #{tpu_custom_call.1} parent=1 // pred_check
      _
    $region3: #{tpu_custom_call.1} parent=1 // pred_check_branch
      %14 = sbr.rel (0) target = $region5
    $region4: #{tpu_custom_call.1} parent=1 // pred_region
      _
    $region5: #{tpu_custom_call.1} parent=1 // pred_fallthru
      _
    // Predicated region
    $region6: #{tpu_custom_call.1} parent=1 // pred_check
      _
    $region7: #{tpu_custom_call.1} parent=1 // pred_check_branch
      %16 = sbr.rel (0) target = $region9
    $region8: #{tpu_custom_call.1} parent=1 // pred_region
      _
    $region9: #{tpu_custom_call.1} parent=1 // pred_fallthru
      _
    // Predicated region
    $region10: #{tpu_custom_call.1} parent=1 // pred_check
      _
    $region11: #{tpu_custom_call.1} parent=1 // pred_check_branch
      %18 = sbr.rel (0) target = $region13
    $region12: #{tpu_custom_call.1} parent=1 // pred_region
      _
    $region13: #{tpu_custom_call.1} parent=1 // pred_fallthru
      _
    // Predicated region
    $region14: #{tpu_custom_call.1} parent=1 // pred_check
      _
    $region15: #{tpu_custom_call.1} parent=1 // pred_check_branch
      %20 = sbr.rel (0) target = $region17
    $region16: #{tpu_custom_call.1} parent=1 // pred_region
      _
    $region17: #{tpu_custom_call.1} parent=1 // pred_fallthru
      _
    // Predicated region
    $region18: #{tpu_custom_call.1} parent=1 // pred_check
      _
    $region19: #{tpu_custom_call.1} parent=1 // pred_check_branch
      %22 = sbr.rel (0) target = $region21
    $region20: #{tpu_custom_call.1} parent=1 // pred_region
      _
    $region21: #{tpu_custom_call.1} parent=1 // pred_fallthru
      _
    %v23 = vld [vmem:[%s0] sm:$0x1]
    %v24 = vld [vmem:[%s0 + $0x1] sm:$0x1]
    %v25 = vld [vmem:[%s1] sm:$0xff]
    %27 = vset.pattern.permute.xlu0 0
    %28 = vperm.xlu0 %27, %v25
    %v29 = vpop.permute.xlu0 %28
    %v31 = vlaneseq
    %v32 = vshrl.u32 %v31, 7
    %v33 = vsub.s32 0, %v32
    %v34 = vrot.slane %v23, %v33
    %v35 = vmul.f32 %v29, %v34
    %36 = vset.pattern.permute.xlu0 1
    %37 = vperm.xlu0 %36, %v25
    %v38 = vpop.permute.xlu0 %37
    %v40 = vlaneseq
    %v41 = vshrl.u32 %v40, 7
    %v42 = vsub.s32 0, %v41
    %v43 = vrot.slane %v24, %v42
    %v44 = vmul.f32 %v38, %v43
    %v45 = vadd.f32 %v35, %v44
    %v46 = vld [vmem:[%s2] sm:$0xff]
    %48 = vset.pattern.permute.xlu0 0
    %49 = vperm.xlu0 %48, %v46
    %v50 = vpop.permute.xlu0 %49
    %v52 = vadd.f32 %v45, %v50
    %v53 = vmax.f32 %v52, 0.0
    %v54 = vld [vmem:[%s3] sm:$0xff]
    %56 = vset.pattern.permute.xlu0 0
    %57 = vperm.xlu0 %56, %v54
    %v58 = vpop.permute.xlu0 %57
    %v60 = vmul.f32 %v58, %v53
    %v61 = vrot.slane %v60, 4
    %v62 = vadd.f32 %v60, %v61
    %v63 = vrot.slane %v62, 2
    %v64 = vadd.f32 %v62, %v63
    %v65 = vrot.slane %v64, 1
    %v66 = vadd.f32 %v64, %v65
    %v67 = vld [vmem:[#allocation2] sm:$0x1]
    %69 = vset.pattern.permute.xlu0 0
    %70 = vperm.xlu0 %69, %v67
    %v71 = vpop.permute.xlu0 %70
    %v73 = vlaneseq
    %v74 = vshrl.u32 %v73, 7
    %v75 = vsub.s32 0, %v74
    %v76 = vrot.slane %v71, %v75
    %v77 = vadd.f32 %v66, %v76
    %78 = vst [vmem:[#allocation3] sm:$0x1] %v77
    // Predicated region
    $region22: #{tpu_custom_call.1} parent=1 // pred_check
      _
    $region23: #{tpu_custom_call.1} parent=1 // pred_check_branch
      %80 = sbr.rel (0) target = $region25
    $region24: #{tpu_custom_call.1} parent=1 // pred_region
      %s82 = ssub.s32 16, 16
      %83 = vsyncadd [#allocation4], %s82
      %s85 = sshll.u32 [#allocation3], 4
      %s86 = int_to_ptr.vmem [resolvable:$true] %s85
      %88 = dma.vmem_to_hbm [thread:$0]  %s86, 16, %s5, [#allocation4]
    $region25: #{tpu_custom_call.1} parent=1 // pred_fallthru
      _
    // Predicated region
    $region26: #{tpu_custom_call.1} parent=1 // pred_check
      _
    $region27: #{tpu_custom_call.1} parent=1 // pred_check_branch
      %90 = sbr.rel (0) target = $region29
    $region28: #{tpu_custom_call.1} parent=1 // pred_region
      %91 = dma.done [#allocation4], 16
    $region29: #{tpu_custom_call.1} parent=1 // pred_fallthru
      _
    %92 = vsyncpa [#allocation4], 1

</llo_original>
